<compile_context>
chip_gen: v5e
topology: v5e:2x2
jax: 0.10.0
libtpu: 0.0.40
codegen_flags: <defaults>
</compile_context>

<pallas_src>
import jax
import jax.numpy as jnp
from jax.experimental import pallas as pl
from jax.experimental.pallas import tpu as pltpu


def fm_kernel(x_ref, v_ref, w_ref, s_ref, b_ref, o_ref):
    """One batch tile of the FM forward.

    x_ref: (TB, D)  input rows (native dtype -> MXU)
    v_ref: (D, K)   factor matrix, resident across grid steps
    w_ref: (1, D)   linear weights (f32)
    s_ref: (1, D)   precomputed rowsum of v*v (f32)
    b_ref: (1, 1)   bias scalar in SMEM
    o_ref: (1, TB)  lane-dense output tile
    """
    x = x_ref[...]                         # native dtype for the MXU
    xf = x.astype(jnp.float32)             # f32 copy for the VPU terms

    # The single MXU matmul of the kernel: (TB, D) @ (D, K) -> (TB, K), f32 acc.
    xv = jnp.dot(x, v_ref[...], preferred_element_type=jnp.float32)

    # Fused VPU multiply + row reduce:
    #   linear term  sum_d x*w   minus   0.5 * sum_d x^2 * s
    # (s = sum_k v^2 replaces the whole x^2 @ v^2 matmul).
    lin_sq = jnp.sum(xf * w_ref[...] - 0.5 * (xf * xf) * s_ref[...], axis=1)  # (TB,)
    inter = 0.5 * jnp.sum(xv * xv, axis=1)                                    # (TB,)

    out = jax.nn.sigmoid(lin_sq + inter + b_ref[0, 0])                        # (TB,)
    o_ref[...] = out[None, :].astype(o_ref.dtype)                             # lane-dense store


def fm_forward(x, v, w, b, *, block_b=512):
    """x: (B, D), v: (D, K), w: (1, D), b: (1,)  ->  (B, 1) float32."""
    B, D = x.shape
    K = v.shape[1]

    # Weight-derived tensors hoisted out of the kernel (computed once, not per tile).
    w_row = w.reshape(1, D).astype(jnp.float32)
    s_row = jnp.sum(v.astype(jnp.float32) ** 2, axis=1).reshape(1, D)  # s[d] = sum_k v[d,k]^2
    b_sc = jnp.asarray(b, jnp.float32).reshape(1, 1)

    # Batch tiling: one tile when B is small, otherwise block_b rows per grid step.
    TB = B if B <= block_b else block_b
    G = -(-B // TB)
    Bp = G * TB
    if Bp != B:
        x = jnp.pad(x, ((0, Bp - B), (0, 0)))  # padded rows are sliced off below

    itemsize = jnp.dtype(x.dtype).itemsize
    flops = 2 * Bp * D * K + 6 * Bp * D
    bytes_accessed = Bp * D * itemsize + (D * K) * jnp.dtype(v.dtype).itemsize \
        + 2 * D * 4 + Bp * 4

    out = pl.pallas_call(
        fm_kernel,
        out_shape=jax.ShapeDtypeStruct((G, TB), jnp.float32),
        grid=(G,),
        in_specs=[
            pl.BlockSpec((TB, D), lambda i: (i, 0)),             # x: batch-tiled
            pl.BlockSpec((D, K), lambda i: (0, 0)),              # v: resident
            pl.BlockSpec((1, D), lambda i: (0, 0)),              # w: resident
            pl.BlockSpec((1, D), lambda i: (0, 0)),              # s: resident
            pl.BlockSpec(memory_space=pltpu.MemorySpace.SMEM),   # bias scalar
        ],
        out_specs=pl.BlockSpec((1, TB), lambda i: (i, 0)),       # lane-dense rows
        compiler_params=pltpu.CompilerParams(
            dimension_semantics=("parallel",),
        ),
        cost_estimate=pl.CostEstimate(
            flops=flops, transcendentals=Bp, bytes_accessed=bytes_accessed),
    )(x, v, w_row, s_row, b_sc)

    return out.reshape(Bp)[:B].reshape(B, 1)


def fm_reference(x, v, w, b):
    linear_part = x @ w.T + b.reshape(1, 1)
    interaction = 0.5 * jnp.sum((x @ v) ** 2 - (x**2) @ (v**2), axis=1, keepdims=True)
    return jax.nn.sigmoid(linear_part + interaction)


if __name__ == "__main__":
    B, D, K = 8, 32, 8

    key = jax.random.PRNGKey(0)
    kx, kv, kw, kb = jax.random.split(key, 4)

    x = jax.random.normal(kx, (B, D), dtype=jnp.float32)
    # v ~ randn * 0.01 as in the PyTorch __init__
    v = jax.random.normal(kv, (D, K), dtype=jnp.float32) * 0.01
    # nn.Linear default init: uniform(-1/sqrt(D), 1/sqrt(D))
    bound = 1.0 / (D**0.5)
    w = jax.random.uniform(kw, (1, D), minval=-bound, maxval=bound, dtype=jnp.float32)
    b = jax.random.uniform(kb, (1,), minval=-bound, maxval=bound, dtype=jnp.float32)

    out = fm_forward(x, v, w, b)
    out = jax.block_until_ready(out)

    ref = fm_reference(x, v, w, b)
    assert out.shape == (B, 1), out.shape
    assert jnp.allclose(out, ref, atol=1e-5, rtol=1e-5), (out, ref)

    print("KERNEL_OK")
</pallas_src>

<mosaic_0001>
module attributes {stable_mosaic.version = 11 : i64} {
  func.func @fm_kernel(%arg0: i32, %arg1: memref<8x32xf32, #tpu.memory_space<vmem>>, %arg2: memref<32x8xf32, #tpu.memory_space<vmem>>, %arg3: memref<1x32xf32, #tpu.memory_space<vmem>>, %arg4: memref<1x32xf32, #tpu.memory_space<vmem>>, %arg5: memref<1x1xf32, #tpu.memory_space<smem>>, %arg6: memref<1x8xf32, #tpu.memory_space<vmem>>) attributes {dimension_semantics = [#tpu.dimension_semantics<parallel>], iteration_bounds = array<i64: 1>, scalar_prefetch = 0 : i64, scratch_operands = 0 : i64, tpu.core_type = #tpu.core_type<tc>, window_params = [{transform_indices = @transform_0, window_bounds = array<i64: 8, 32>}, {pipeline_mode = #tpu.pipeline_mode<synchronous>, transform_indices = @transform_1, window_bounds = array<i64: 32, 8>}, {pipeline_mode = #tpu.pipeline_mode<synchronous>, transform_indices = @transform_2, window_bounds = array<i64: 1, 32>}, {pipeline_mode = #tpu.pipeline_mode<synchronous>, transform_indices = @transform_3, window_bounds = array<i64: 1, 32>}, {transform_indices = @transform_4, window_bounds = array<i64: 1, 1>}, {transform_indices = @transform_5, window_bounds = array<i64: 1, 8>}]} {
    %c0 = arith.constant 0 : index
    %c0_0 = arith.constant 0 : index
    %0 = vector.load %arg1[%c0, %c0_0] : memref<8x32xf32, #tpu.memory_space<vmem>>, vector<8x32xf32>
    %c0_1 = arith.constant 0 : index
    %c0_2 = arith.constant 0 : index
    %1 = vector.load %arg2[%c0_1, %c0_2] : memref<32x8xf32, #tpu.memory_space<vmem>>, vector<32x8xf32>
    %cst = arith.constant dense<0.000000e+00> : vector<8x8xf32>
    %2 = tpu.matmul %0, %1, %cst {dimension_numbers = #tpu.dot_dimension_numbers<[1], [0], [0], [1], [0, 0, 1, 1], [], []>} : vector<8x32xf32>, vector<32x8xf32>, vector<8x8xf32> -> vector<8x8xf32>
    %c0_3 = arith.constant 0 : index
    %c0_4 = arith.constant 0 : index
    %3 = vector.load %arg3[%c0_3, %c0_4] : memref<1x32xf32, #tpu.memory_space<vmem>>, vector<1x32xf32>
    %4 = vector.broadcast %3 : vector<1x32xf32> to vector<8x32xf32>
    %5 = arith.mulf %0, %4 : vector<8x32xf32>
    %6 = arith.mulf %0, %0 : vector<8x32xf32>
    %cst_5 = arith.constant 5.000000e-01 : f32
    %7 = vector.broadcast %cst_5 : f32 to vector<8x32xf32>
    %8 = arith.mulf %7, %6 : vector<8x32xf32>
    %c0_6 = arith.constant 0 : index
    %c0_7 = arith.constant 0 : index
    %9 = vector.load %arg4[%c0_6, %c0_7] : memref<1x32xf32, #tpu.memory_space<vmem>>, vector<1x32xf32>
    %10 = vector.broadcast %9 : vector<1x32xf32> to vector<8x32xf32>
    %11 = arith.mulf %8, %10 : vector<8x32xf32>
    %12 = arith.subf %5, %11 : vector<8x32xf32>
    %cst_8 = arith.constant dense<0.000000e+00> : vector<8xf32>
    %13 = vector.multi_reduction <add>, %12, %cst_8 [1] : vector<8x32xf32> to vector<8xf32>
    %14 = arith.mulf %2, %2 : vector<8x8xf32>
    %cst_9 = arith.constant dense<0.000000e+00> : vector<8xf32>
    %15 = vector.multi_reduction <add>, %14, %cst_9 [1] : vector<8x8xf32> to vector<8xf32>
    %cst_10 = arith.constant 5.000000e-01 : f32
    %16 = vector.broadcast %cst_10 : f32 to vector<8xf32>
    %17 = arith.mulf %16, %15 : vector<8xf32>
    %18 = arith.addf %13, %17 : vector<8xf32>
    %c0_11 = arith.constant 0 : index
    %c0_12 = arith.constant 0 : index
    %19 = memref.load %arg5[%c0_11, %c0_12] : memref<1x1xf32, #tpu.memory_space<smem>>
    %20 = vector.broadcast %19 : f32 to vector<8xf32>
    %21 = arith.addf %18, %20 : vector<8xf32>
    %22 = arith.negf %21 : vector<8xf32>
    %23 = math.exp %22 : vector<8xf32>
    %cst_13 = arith.constant 1.000000e+00 : f32
    %24 = vector.broadcast %cst_13 : f32 to vector<8xf32>
    %25 = arith.addf %24, %23 : vector<8xf32>
    %26 = arith.divf %24, %25 : vector<8xf32>
    %27 = vector.shape_cast %26 : vector<8xf32> to vector<1x8xf32>
    %c0_14 = arith.constant 0 : index
    %c0_15 = arith.constant 0 : index
    %28 = vector.load %arg6[%c0_14, %c0_15] : memref<1x8xf32, #tpu.memory_space<vmem>>, vector<1x8xf32>
    tpu.vector_store %arg6[%c0_14, %c0_15], %27 {strides = array<i32>} : memref<1x8xf32, #tpu.memory_space<vmem>>, vector<1x8xf32>,
    return
  }
  func.func @transform_0(%arg0: i32) -> (i32, i32) {
    %c0_i32 = arith.constant 0 : i32
    %c0_i32_0 = arith.constant 0 : i32
    return %arg0, %c0_i32 : i32, i32
  }
  func.func @transform_1(%arg0: i32) -> (i32, i32) {
    %c0_i32 = arith.constant 0 : i32
    %c0_i32_0 = arith.constant 0 : i32
    %c0_i32_1 = arith.constant 0 : i32
    return %c0_i32, %c0_i32_0 : i32, i32
  }
  func.func @transform_2(%arg0: i32) -> (i32, i32) {
    %c0_i32 = arith.constant 0 : i32
    %c0_i32_0 = arith.constant 0 : i32
    %c0_i32_1 = arith.constant 0 : i32
    return %c0_i32, %c0_i32_0 : i32, i32
  }
  func.func @transform_3(%arg0: i32) -> (i32, i32) {
    %c0_i32 = arith.constant 0 : i32
    %c0_i32_0 = arith.constant 0 : i32
    %c0_i32_1 = arith.constant 0 : i32
    return %c0_i32, %c0_i32_0 : i32, i32
  }
  func.func @transform_4(%arg0: i32) -> (i32, i32) {
    %c0_i32 = arith.constant 0 : i32
    %c0_i32_0 = arith.constant 0 : i32
    %c0_i32_1 = arith.constant 0 : i32
    return %c0_i32, %c0_i32_0 : i32, i32
  }
  func.func @transform_5(%arg0: i32) -> (i32, i32) {
    %c0_i32 = arith.constant 0 : i32
    %c0_i32_0 = arith.constant 0 : i32
    return %arg0, %c0_i32 : i32, i32
  }
}

</mosaic_0001>

<llo_original>
// kernel: tpu_custom_call.1
$region0: #{tpu_custom_call.1}
  #allocation0 [shape = 'u32[]', space=smem, size = 0x4, offset = 0x4, fixed_abs, tag = 'smem constant byte address 0x4 - core index']
  #allocation1 [shape = 'u32[72,128]{1,0:T(1,128)}', space=vmem, size = 0x9000, scoped, tag = 'internal scratch']
  #allocation2 [shape = 'f32[1,1]{1,0:T(1,128)S(6)}', space=smem, size = 0x200, scoped, tag = 'scoped memory for tpu_custom_call.1']
  %s0 = inlined_call_operand.vmem [shape: f32[8,32], index: 0, kind: input, shape index: {}]
  %s1 = inlined_call_operand.vmem [shape: f32[32,8], index: 1, kind: input, shape index: {}]
  %s2 = inlined_call_operand.vmem [shape: f32[1,32], index: 2, kind: input, shape index: {}]
  %s3 = inlined_call_operand.vmem [shape: f32[1,32], index: 3, kind: input, shape index: {}]
  %s4 = inlined_call_operand.<no memory space> [shape: f32[1,1], index: 4, kind: input, shape index: {}]
  %s5 = inlined_call_operand.hbm [shape: f32[1,8], index: 5, kind: output, shape index: {}]
  %s6 = sld [smem:[#allocation0]]
  $region30: #{tpu_custom_call.1} parent=0
    _
  %s8 = ssub.s32 1, %s6
  %s9 = scalar_select 0, %s8, %s6
  %10 = sst [smem:[#allocation2]] %s4
  $region1: #{tpu_custom_call.1} parent=0
    #allocation3 [shape = 'u8[512]{0}', space=vmem, size = 0x400, scoped, tag = 'output window, operand 0, single buffered']
    #allocation4 [shape = 's32[1]{0}', space=sflag, size = 0x4, scoped, tag = 'scoped memory for tpu_custom_call.1']
    %11 = vsyncpa [#allocation4], 0
    // Predicated region
    $region2: #{tpu_custom_call.1} parent=1 // pred_check
      _
    $region3: #{tpu_custom_call.1} parent=1 // pred_check_branch
      %13 = sbr.rel (0) target = $region5
    $region4: #{tpu_custom_call.1} parent=1 // pred_region
      _
    $region5: #{tpu_custom_call.1} parent=1 // pred_fallthru
      _
    // Predicated region
    $region6: #{tpu_custom_call.1} parent=1 // pred_check
      _
    $region7: #{tpu_custom_call.1} parent=1 // pred_check_branch
      %15 = sbr.rel (0) target = $region9
    $region8: #{tpu_custom_call.1} parent=1 // pred_region
      _
    $region9: #{tpu_custom_call.1} parent=1 // pred_fallthru
      _
    // Predicated region
    $region10: #{tpu_custom_call.1} parent=1 // pred_check
      _
    $region11: #{tpu_custom_call.1} parent=1 // pred_check_branch
      %17 = sbr.rel (0) target = $region13
    $region12: #{tpu_custom_call.1} parent=1 // pred_region
      _
    $region13: #{tpu_custom_call.1} parent=1 // pred_fallthru
      _
    // Predicated region
    $region14: #{tpu_custom_call.1} parent=1 // pred_check
      _
    $region15: #{tpu_custom_call.1} parent=1 // pred_check_branch
      %19 = sbr.rel (0) target = $region17
    $region16: #{tpu_custom_call.1} parent=1 // pred_region
      _
    $region17: #{tpu_custom_call.1} parent=1 // pred_fallthru
      _
    // Predicated region
    $region18: #{tpu_custom_call.1} parent=1 // pred_check
      _
    $region19: #{tpu_custom_call.1} parent=1 // pred_check_branch
      %21 = sbr.rel (0) target = $region21
    $region20: #{tpu_custom_call.1} parent=1 // pred_region
      _
    $region21: #{tpu_custom_call.1} parent=1 // pred_fallthru
      _
    %v22 = vld [vmem:[%s0] sm:$0xff]
    %v23 = vld [vmem:[%s1] sm:$0xff]
    %v24 = vld [vmem:[%s1 + $0x8] sm:$0xff]
    %v25 = vld [vmem:[%s1 + $0x10] sm:$0xff]
    %v26 = vld [vmem:[%s1 + $0x18] sm:$0xff]
    %vm27 = vcmask 261120
    %v29 = vsel %vm27, %v22, 0
    %31 = vmatpush.msra.mxu0 0.0
    %32 = vmatpush.msra.mxu0 0.0
    %33 = vmatpush.msra.mxu0 0.0
    %34 = vmatpush.msra.mxu0 0.0
    %35 = vmatpush.msra.mxu0 0.0
    %36 = vmatpush.msra.mxu0 0.0
    %37 = vmatpush.msra.mxu0 0.0
    %38 = vmatpush.msra.mxu0 0.0
    %39 = vmatpush.msra.mxu0 0.0
    %40 = vmatpush.msra.mxu0 0.0
    %41 = vmatpush.msra.mxu0 0.0
    %42 = vmatpush.msra.mxu0 0.0
    %43 = vmatpush.msra.mxu0 %v26
    %44 = vmatpush.msra.mxu0 %v25
    %45 = vmatpush.msra.mxu0 %v24
    %46 = vmatpush.msra.mxu0 %v23
    %47 = vmatmul.f32.gmra.mxu0 %v29
    %v48 = vpop.f32.mrf.mxu0
    %v49 = vadd.f32 0.0, %v48
    %50 = vdwg.mxu0
    %v51 = vld [vmem:[%s2] sm:$0x1]
    %v53 = vperm.slane %v51, 0
    %v55 = vmul.f32 %v22, %v53
    %v56 = vmul.f32 %v22, %v22
    %v57 = vmul.f32 %v56, 0.5
    %v58 = vld [vmem:[%s3] sm:$0x1]
    %v60 = vperm.slane %v58, 0
    %v62 = vmul.f32 %v57, %v60
    %v63 = vsub.f32 %v55, %v62
    %v64 = vsel %vm27, %v63, 0.0
    %65 = vadd.xlane.f32.xlu0 %v64
    %v66 = vpop.xlane.xlu0 %65
    %v67 = vmul.f32 %v49, %v49
    %vm68 = vcmask 64512
    %v69 = vsel %vm68, %v67, 0.0
    %70 = vadd.xlane.f32.xlu0 %v69
    %v71 = vpop.xlane.xlu0 %70
    %v72 = vmul.f32 %v71, 0.5
    %v73 = vadd.f32 %v66, %v72
    %s74 = sld [smem:[#allocation2]]
    %v75 = vstv %s74
    %v76 = vadd.f32 %v73, %v75
    %v77 = vxor.u32 %v76, 2147483648
    %v78 = vmul.f32 %v77, 1.442695
    %v79 = vpow.pop %v78
    %v80 = vadd.f32 %v79, 1.0
    %v81 = vrcp.pop %v80
    %v82 = vmul.f32 %v80, %v81
    %v83 = vsub.f32 1.0, %v82
    %v84 = vmul.f32 %v81, %v83
    %v85 = vadd.f32 %v81, %v84
    %vm86 = vweird.f32 %v80
    %vm87 = vweird.f32 %v81
    %vm88 = vmor %vm86, %vm87
    %v89 = vsel %vm88, %v81, %v85
    %v90 = vand.u32 2147483647, %v80
    %vm91 = vcmp.eq.f32.partialorder %v90, 8.507059e+37
    %v92 = vand.u32 %v80, 2147483648
    %v93 = vor.u32 1.1754944e-38, %v92
    %v94 = vsel %vm91, %v93, %v89
    %v95 = vmul.f32 1.0, %v94
    %v97 = vlaneseq
    %v98 = vand.u32 %v97, 127
    %v99 = vperm.slane %v95, %v98
    %vm101 = vcmask 57344
    %102 = vst.msk [vmem:[#allocation3] sm:$0x1] %vm101, %v99
    // Predicated region
    $region22: #{tpu_custom_call.1} parent=1 // pred_check
      _
    $region23: #{tpu_custom_call.1} parent=1 // pred_check_branch
      %104 = sbr.rel (0) target = $region25
    $region24: #{tpu_custom_call.1} parent=1 // pred_region
      %106 = vsyncadd [#allocation4], 0
      %s108 = sshll.u32 [#allocation3], 4
      %s109 = int_to_ptr.vmem [resolvable:$true] %s108
      %s110 = sshll.u32 %s5, 4
      %s111 = int_to_ptr.hbm [resolvable:$true] %s110
      %113 = dma.vmem_to_hbm [thread:$0]  %s109, 16, %s111, [#allocation4]
    $region25: #{tpu_custom_call.1} parent=1 // pred_fallthru
      _
    // Predicated region
    $region26: #{tpu_custom_call.1} parent=1 // pred_check
      _
    $region27: #{tpu_custom_call.1} parent=1 // pred_check_branch
      %115 = sbr.rel (0) target = $region29
    $region28: #{tpu_custom_call.1} parent=1 // pred_region
      %117 = dma.done [#allocation4], 16
    $region29: #{tpu_custom_call.1} parent=1 // pred_fallthru
      _
    %118 = vsyncpa [#allocation4], 1

</llo_original>
